<compile_context>
chip_gen: v7x
topology: tpu7x:2x2x1
jax: 0.10.0
libtpu: 0.0.40
codegen_flags: <defaults>
</compile_context>

<pallas_src>
import jax
import jax.numpy as jnp
from jax import lax
from jax.experimental import pallas as pl
from jax.experimental.pallas import tpu as pltpu

MID = 4  # mid_channels in CSAM


def _shift_plane(t, ry, rx, row, col):
    """Return s with s[h, w] = t[h + ry, w + rx], zero outside bounds.

    ry, rx are static Python ints in {-1, 0, 1}.  On (8,128)-tile-aligned
    planes use an XLU rotate (pltpu.roll) + iota mask for the wrapped row/col;
    otherwise use slice + concat with explicit zero fill (always lowers).
    """
    H, W = t.shape
    use_roll = (H % 8 == 0) and (W % 128 == 0)

    if use_roll:
        out = t
        if ry != 0:
            out = pltpu.roll(out, (-ry) % H, axis=0)
        if rx != 0:
            out = pltpu.roll(out, (-rx) % W, axis=1)
        cond = None
        if ry == -1:
            cond = row >= 1
        elif ry == 1:
            cond = row < H - 1
        if rx == -1:
            c = col >= 1
            cond = c if cond is None else cond & c
        elif rx == 1:
            c = col < W - 1
            cond = c if cond is None else cond & c
        if cond is not None:
            out = jnp.where(cond, out, 0.0)
        return out

    out = t
    if ry == 1:
        out = jnp.concatenate([out[1:, :], jnp.zeros((1, W), t.dtype)], axis=0)
    elif ry == -1:
        out = jnp.concatenate([jnp.zeros((1, W), t.dtype), out[:-1, :]], axis=0)
    if rx == 1:
        out = jnp.concatenate([out[:, 1:], jnp.zeros((H, 1), t.dtype)], axis=1)
    elif rx == -1:
        out = jnp.concatenate([jnp.zeros((H, 1), t.dtype), out[:, :-1]], axis=1)
    return out


def _csam_kernel(x_ref, w1_ref, b1_ref, w2_ref, o_ref):
    # x_ref, o_ref: (BN, C, H, W) VMEM blocks (BN batch images per grid step).
    # w1_ref: (C, MID) SMEM  -- 1x1 conv weight (y1[m] += w1[c, m] * relu(x)[c])
    # b1_ref: (MID,)   SMEM  -- 1x1 conv bias
    # w2_ref: (9, MID) SMEM  -- 3x3 conv weight, taps row-major (dy*3 + dx)
    bn, num_c, H, W = x_ref.shape
    mid = w1_ref.shape[1]

    use_roll = (H % 8 == 0) and (W % 128 == 0)
    if use_roll:
        row = lax.broadcasted_iota(jnp.int32, (H, W), 0)
        col = lax.broadcasted_iota(jnp.int32, (H, W), 1)
    else:
        row = col = None

    for b in range(bn):
        # Load each channel plane once; keep x (for the gate product) and relu(x).
        x_planes = [x_ref[b, c] for c in range(num_c)]
        relu_planes = [jnp.maximum(p, 0.0) for p in x_planes]

        # conv1: 1x1, C -> MID, with bias.  Scalar-weighted VPU FMAs per plane.
        y1 = []
        for m in range(mid):
            acc_m = b1_ref[m] + w1_ref[0, m] * relu_planes[0]
            for c in range(1, num_c):
                acc_m = acc_m + w1_ref[c, m] * relu_planes[c]
            y1.append(acc_m)

        # conv2: 3x3, MID -> 1, padding=1, no bias.  For each tap: mix the MID
        # planes with scalar weights, then shift the mixed plane with zero fill
        # (== zero padding of the post-bias y1, matching PyTorch).
        acc = None
        for dy in range(3):
            for dx in range(3):
                k = dy * 3 + dx
                t = w2_ref[k, 0] * y1[0]
                for m in range(1, mid):
                    t = t + w2_ref[k, m] * y1[m]
                t = _shift_plane(t, dy - 1, dx - 1, row, col)
                acc = t if acc is None else acc + t

        gate = jax.nn.sigmoid(acc)          # (H, W), broadcast over channels
        for c in range(num_c):
            o_ref[b, c] = (x_planes[c] * gate).astype(o_ref.dtype)


def _pick_block_n(n, per_image_bytes, target_bytes=1 << 20):
    """Largest divisor of n whose block stays under target_bytes, keeping
    >= 2 grid steps when n >= 2 (so both v7x TensorCores get work)."""
    best = 1
    for d in range(1, n + 1):
        if n % d != 0:
            continue
        if d * per_image_bytes > target_bytes:
            continue
        if d != 1 and n // d < 2:
            continue
        best = d
    return best


def csam_forward(x, w1, b1, w2):
    """x: (N, C, H, W); w1: (C, MID); b1: (MID,); w2: (3, 3, MID). All f32."""
    N, C, H, W = x.shape
    mid = w1.shape[1]
    assert w1.shape == (C, mid) and b1.shape == (mid,) and w2.shape == (3, 3, mid)
    w2_flat = w2.reshape(9, mid)            # taps row-major: dy*3 + dx

    per_image_bytes = C * H * W * x.dtype.itemsize
    bn = _pick_block_n(N, per_image_bytes)
    block = (bn, C, H, W)
    block_bytes = bn * per_image_bytes
    # Double-buffered input + output blocks plus per-plane intermediates.
    vmem_limit = int(min(max(8 * block_bytes + (2 << 20), 16 << 20), 100 << 20))
    # TODO(synk): for very large feature maps (block_bytes >~ 8 MiB, e.g.
    # 256x256x64) add an H-tile grid axis with a 1-row halo so the kernel also
    # fits v7x's 64 MiB VMEM.

    return pl.pallas_call(
        _csam_kernel,
        out_shape=jax.ShapeDtypeStruct((N, C, H, W), x.dtype),
        grid=(N // bn,),
        in_specs=[
            pl.BlockSpec(block, lambda n: (n, 0, 0, 0)),
            pl.BlockSpec(memory_space=pltpu.MemorySpace.SMEM),   # w1 (C, MID)
            pl.BlockSpec(memory_space=pltpu.MemorySpace.SMEM),   # b1 (MID,)
            pl.BlockSpec(memory_space=pltpu.MemorySpace.SMEM),   # w2 (9, MID)
        ],
        out_specs=pl.BlockSpec(block, lambda n: (n, 0, 0, 0)),
        compiler_params=pltpu.CompilerParams(
            dimension_semantics=("parallel",),
            vmem_limit_bytes=vmem_limit,
        ),
    )(x, w1, b1, w2_flat)


def csam_reference(x_nchw, w1, b1, w2):
    """Pure-JAX reference (NCHW, matches PyTorch semantics)."""
    mid = w1.shape[1]
    y = jnp.maximum(x_nchw, 0.0)
    # conv1: 1x1. Here w1 is (in, out) -> OIHW (out, in, 1, 1).
    k1 = jnp.transpose(w1)[:, :, None, None]
    y = lax.conv_general_dilated(y, k1, (1, 1), "VALID",
                                 dimension_numbers=("NCHW", "OIHW", "NCHW"))
    y = y + b1.reshape(1, mid, 1, 1)
    # conv2: 3x3, pad=1. w2 is (kh, kw, in) -> (1, in, kh, kw).
    k2 = jnp.transpose(w2, (2, 0, 1))[None]
    y = lax.conv_general_dilated(y, k2, (1, 1), ((1, 1), (1, 1)),
                                 dimension_numbers=("NCHW", "OIHW", "NCHW"))
    y = jax.nn.sigmoid(y)
    return x_nchw * y


if __name__ == "__main__":
    key = jax.random.PRNGKey(0)
    k_x, k_w1, k_b1, k_w2 = jax.random.split(key, 4)

    N, C, H, W = 2, 4, 16, 16
    x = jax.random.normal(k_x, (N, C, H, W), dtype=jnp.float32)

    # Parameter shapes from CSAM.__init__ (channels=C, mid_channels=4).
    w1 = 0.1 * jax.random.normal(k_w1, (C, MID), dtype=jnp.float32)     # conv1 weight
    w2 = 0.1 * jax.random.normal(k_w2, (3, 3, MID), dtype=jnp.float32)  # conv2 weight
    b1_zero = jnp.zeros((MID,), dtype=jnp.float32)                      # module's 0-init bias
    b1_rand = 0.1 * jax.random.normal(k_b1, (MID,), dtype=jnp.float32)  # bias/padding check

    for b1 in (b1_zero, b1_rand):
        out = csam_forward(x, w1, b1, w2)
        jax.block_until_ready(out)
        ref = csam_reference(x, w1, b1, w2)
        assert out.shape == (N, C, H, W)
        err = float(jnp.max(jnp.abs(out - ref)))
        assert jnp.allclose(out, ref, atol=1e-4, rtol=1e-4), f"max abs err {err}"

    print("KERNEL_OK")
</pallas_src>

<mosaic_0001>
module attributes {stable_mosaic.version = 11 : i64} {
  func.func @_csam_kernel(%arg0: i32, %arg1: memref<1x4x16x16xf32, #tpu.memory_space<vmem>>, %arg2: memref<4x4xf32, #tpu.memory_space<smem>>, %arg3: memref<4xf32, #tpu.memory_space<smem>>, %arg4: memref<9x4xf32, #tpu.memory_space<smem>>, %arg5: memref<1x4x16x16xf32, #tpu.memory_space<vmem>>) attributes {dimension_semantics = [#tpu.dimension_semantics<parallel>], iteration_bounds = array<i64: 2>, scalar_prefetch = 0 : i64, scratch_operands = 0 : i64, tpu.core_type = #tpu.core_type<tc>, window_params = [{transform_indices = @transform_0, window_bounds = array<i64: 1, 4, 16, 16>}, {transform_indices = @transform_1, window_bounds = array<i64: 4, 4>}, {transform_indices = @transform_2, window_bounds = array<i64: 4>}, {transform_indices = @transform_3, window_bounds = array<i64: 9, 4>}, {transform_indices = @transform_4, window_bounds = array<i64: 1, 4, 16, 16>}]} {
    %c0 = arith.constant 0 : index
    %c0_0 = arith.constant 0 : index
    %c0_1 = arith.constant 0 : index
    %c0_2 = arith.constant 0 : index
    %0 = vector.load %arg1[%c0, %c0_0, %c0_1, %c0_2] : memref<1x4x16x16xf32, #tpu.memory_space<vmem>>, vector<1x1x16x16xf32>
    %1 = vector.shape_cast %0 : vector<1x1x16x16xf32> to vector<16x16xf32>
    %c0_3 = arith.constant 0 : index
    %c1 = arith.constant 1 : index
    %c0_4 = arith.constant 0 : index
    %c0_5 = arith.constant 0 : index
    %2 = vector.load %arg1[%c0_3, %c1, %c0_4, %c0_5] : memref<1x4x16x16xf32, #tpu.memory_space<vmem>>, vector<1x1x16x16xf32>
    %3 = vector.shape_cast %2 : vector<1x1x16x16xf32> to vector<16x16xf32>
    %c0_6 = arith.constant 0 : index
    %c2 = arith.constant 2 : index
    %c0_7 = arith.constant 0 : index
    %c0_8 = arith.constant 0 : index
    %4 = vector.load %arg1[%c0_6, %c2, %c0_7, %c0_8] : memref<1x4x16x16xf32, #tpu.memory_space<vmem>>, vector<1x1x16x16xf32>
    %5 = vector.shape_cast %4 : vector<1x1x16x16xf32> to vector<16x16xf32>
    %c0_9 = arith.constant 0 : index
    %c3 = arith.constant 3 : index
    %c0_10 = arith.constant 0 : index
    %c0_11 = arith.constant 0 : index
    %6 = vector.load %arg1[%c0_9, %c3, %c0_10, %c0_11] : memref<1x4x16x16xf32, #tpu.memory_space<vmem>>, vector<1x1x16x16xf32>
    %7 = vector.shape_cast %6 : vector<1x1x16x16xf32> to vector<16x16xf32>
    %cst = arith.constant 0.000000e+00 : f32
    %8 = vector.broadcast %cst : f32 to vector<16x16xf32>
    %9 = arith.maximumf %1, %8 : vector<16x16xf32>
    %cst_12 = arith.constant 0.000000e+00 : f32
    %10 = vector.broadcast %cst_12 : f32 to vector<16x16xf32>
    %11 = arith.maximumf %3, %10 : vector<16x16xf32>
    %cst_13 = arith.constant 0.000000e+00 : f32
    %12 = vector.broadcast %cst_13 : f32 to vector<16x16xf32>
    %13 = arith.maximumf %5, %12 : vector<16x16xf32>
    %cst_14 = arith.constant 0.000000e+00 : f32
    %14 = vector.broadcast %cst_14 : f32 to vector<16x16xf32>
    %15 = arith.maximumf %7, %14 : vector<16x16xf32>
    %c0_15 = arith.constant 0 : index
    %16 = memref.load %arg3[%c0_15] : memref<4xf32, #tpu.memory_space<smem>>
    %c0_16 = arith.constant 0 : index
    %c0_17 = arith.constant 0 : index
    %17 = memref.load %arg2[%c0_16, %c0_17] : memref<4x4xf32, #tpu.memory_space<smem>>
    %18 = vector.broadcast %17 : f32 to vector<16x16xf32>
    %19 = arith.mulf %18, %9 : vector<16x16xf32>
    %20 = vector.broadcast %16 : f32 to vector<16x16xf32>
    %21 = arith.addf %20, %19 : vector<16x16xf32>
    %c1_18 = arith.constant 1 : index
    %c0_19 = arith.constant 0 : index
    %22 = memref.load %arg2[%c1_18, %c0_19] : memref<4x4xf32, #tpu.memory_space<smem>>
    %23 = vector.broadcast %22 : f32 to vector<16x16xf32>
    %24 = arith.mulf %23, %11 : vector<16x16xf32>
    %25 = arith.addf %21, %24 : vector<16x16xf32>
    %c2_20 = arith.constant 2 : index
    %c0_21 = arith.constant 0 : index
    %26 = memref.load %arg2[%c2_20, %c0_21] : memref<4x4xf32, #tpu.memory_space<smem>>
    %27 = vector.broadcast %26 : f32 to vector<16x16xf32>
    %28 = arith.mulf %27, %13 : vector<16x16xf32>
    %29 = arith.addf %25, %28 : vector<16x16xf32>
    %c3_22 = arith.constant 3 : index
    %c0_23 = arith.constant 0 : index
    %30 = memref.load %arg2[%c3_22, %c0_23] : memref<4x4xf32, #tpu.memory_space<smem>>
    %31 = vector.broadcast %30 : f32 to vector<16x16xf32>
    %32 = arith.mulf %31, %15 : vector<16x16xf32>
    %33 = arith.addf %29, %32 : vector<16x16xf32>
    %c1_24 = arith.constant 1 : index
    %34 = memref.load %arg3[%c1_24] : memref<4xf32, #tpu.memory_space<smem>>
    %c0_25 = arith.constant 0 : index
    %c1_26 = arith.constant 1 : index
    %35 = memref.load %arg2[%c0_25, %c1_26] : memref<4x4xf32, #tpu.memory_space<smem>>
    %36 = vector.broadcast %35 : f32 to vector<16x16xf32>
    %37 = arith.mulf %36, %9 : vector<16x16xf32>
    %38 = vector.broadcast %34 : f32 to vector<16x16xf32>
    %39 = arith.addf %38, %37 : vector<16x16xf32>
    %c1_27 = arith.constant 1 : index
    %c1_28 = arith.constant 1 : index
    %40 = memref.load %arg2[%c1_27, %c1_28] : memref<4x4xf32, #tpu.memory_space<smem>>
    %41 = vector.broadcast %40 : f32 to vector<16x16xf32>
    %42 = arith.mulf %41, %11 : vector<16x16xf32>
    %43 = arith.addf %39, %42 : vector<16x16xf32>
    %c2_29 = arith.constant 2 : index
    %c1_30 = arith.constant 1 : index
    %44 = memref.load %arg2[%c2_29, %c1_30] : memref<4x4xf32, #tpu.memory_space<smem>>
    %45 = vector.broadcast %44 : f32 to vector<16x16xf32>
    %46 = arith.mulf %45, %13 : vector<16x16xf32>
    %47 = arith.addf %43, %46 : vector<16x16xf32>
    %c3_31 = arith.constant 3 : index
    %c1_32 = arith.constant 1 : index
    %48 = memref.load %arg2[%c3_31, %c1_32] : memref<4x4xf32, #tpu.memory_space<smem>>
    %49 = vector.broadcast %48 : f32 to vector<16x16xf32>
    %50 = arith.mulf %49, %15 : vector<16x16xf32>
    %51 = arith.addf %47, %50 : vector<16x16xf32>
    %c2_33 = arith.constant 2 : index
    %52 = memref.load %arg3[%c2_33] : memref<4xf32, #tpu.memory_space<smem>>
    %c0_34 = arith.constant 0 : index
    %c2_35 = arith.constant 2 : index
    %53 = memref.load %arg2[%c0_34, %c2_35] : memref<4x4xf32, #tpu.memory_space<smem>>
    %54 = vector.broadcast %53 : f32 to vector<16x16xf32>
    %55 = arith.mulf %54, %9 : vector<16x16xf32>
    %56 = vector.broadcast %52 : f32 to vector<16x16xf32>
    %57 = arith.addf %56, %55 : vector<16x16xf32>
    %c1_36 = arith.constant 1 : index
    %c2_37 = arith.constant 2 : index
    %58 = memref.load %arg2[%c1_36, %c2_37] : memref<4x4xf32, #tpu.memory_space<smem>>
    %59 = vector.broadcast %58 : f32 to vector<16x16xf32>
    %60 = arith.mulf %59, %11 : vector<16x16xf32>
    %61 = arith.addf %57, %60 : vector<16x16xf32>
    %c2_38 = arith.constant 2 : index
    %c2_39 = arith.constant 2 : index
    %62 = memref.load %arg2[%c2_38, %c2_39] : memref<4x4xf32, #tpu.memory_space<smem>>
    %63 = vector.broadcast %62 : f32 to vector<16x16xf32>
    %64 = arith.mulf %63, %13 : vector<16x16xf32>
    %65 = arith.addf %61, %64 : vector<16x16xf32>
    %c3_40 = arith.constant 3 : index
    %c2_41 = arith.constant 2 : index
    %66 = memref.load %arg2[%c3_40, %c2_41] : memref<4x4xf32, #tpu.memory_space<smem>>
    %67 = vector.broadcast %66 : f32 to vector<16x16xf32>
    %68 = arith.mulf %67, %15 : vector<16x16xf32>
    %69 = arith.addf %65, %68 : vector<16x16xf32>
    %c3_42 = arith.constant 3 : index
    %70 = memref.load %arg3[%c3_42] : memref<4xf32, #tpu.memory_space<smem>>
    %c0_43 = arith.constant 0 : index
    %c3_44 = arith.constant 3 : index
    %71 = memref.load %arg2[%c0_43, %c3_44] : memref<4x4xf32, #tpu.memory_space<smem>>
    %72 = vector.broadcast %71 : f32 to vector<16x16xf32>
    %73 = arith.mulf %72, %9 : vector<16x16xf32>
    %74 = vector.broadcast %70 : f32 to vector<16x16xf32>
    %75 = arith.addf %74, %73 : vector<16x16xf32>
    %c1_45 = arith.constant 1 : index
    %c3_46 = arith.constant 3 : index
    %76 = memref.load %arg2[%c1_45, %c3_46] : memref<4x4xf32, #tpu.memory_space<smem>>
    %77 = vector.broadcast %76 : f32 to vector<16x16xf32>
    %78 = arith.mulf %77, %11 : vector<16x16xf32>
    %79 = arith.addf %75, %78 : vector<16x16xf32>
    %c2_47 = arith.constant 2 : index
    %c3_48 = arith.constant 3 : index
    %80 = memref.load %arg2[%c2_47, %c3_48] : memref<4x4xf32, #tpu.memory_space<smem>>
    %81 = vector.broadcast %80 : f32 to vector<16x16xf32>
    %82 = arith.mulf %81, %13 : vector<16x16xf32>
    %83 = arith.addf %79, %82 : vector<16x16xf32>
    %c3_49 = arith.constant 3 : index
    %c3_50 = arith.constant 3 : index
    %84 = memref.load %arg2[%c3_49, %c3_50] : memref<4x4xf32, #tpu.memory_space<smem>>
    %85 = vector.broadcast %84 : f32 to vector<16x16xf32>
    %86 = arith.mulf %85, %15 : vector<16x16xf32>
    %87 = arith.addf %83, %86 : vector<16x16xf32>
    %c0_51 = arith.constant 0 : index
    %c0_52 = arith.constant 0 : index
    %88 = memref.load %arg4[%c0_51, %c0_52] : memref<9x4xf32, #tpu.memory_space<smem>>
    %89 = vector.broadcast %88 : f32 to vector<16x16xf32>
    %90 = arith.mulf %89, %33 : vector<16x16xf32>
    %c0_53 = arith.constant 0 : index
    %c1_54 = arith.constant 1 : index
    %91 = memref.load %arg4[%c0_53, %c1_54] : memref<9x4xf32, #tpu.memory_space<smem>>
    %92 = vector.broadcast %91 : f32 to vector<16x16xf32>
    %93 = arith.mulf %92, %51 : vector<16x16xf32>
    %94 = arith.addf %90, %93 : vector<16x16xf32>
    %c0_55 = arith.constant 0 : index
    %c2_56 = arith.constant 2 : index
    %95 = memref.load %arg4[%c0_55, %c2_56] : memref<9x4xf32, #tpu.memory_space<smem>>
    %96 = vector.broadcast %95 : f32 to vector<16x16xf32>
    %97 = arith.mulf %96, %69 : vector<16x16xf32>
    %98 = arith.addf %94, %97 : vector<16x16xf32>
    %c0_57 = arith.constant 0 : index
    %c3_58 = arith.constant 3 : index
    %99 = memref.load %arg4[%c0_57, %c3_58] : memref<9x4xf32, #tpu.memory_space<smem>>
    %100 = vector.broadcast %99 : f32 to vector<16x16xf32>
    %101 = arith.mulf %100, %87 : vector<16x16xf32>
    %102 = arith.addf %98, %101 : vector<16x16xf32>
    %cst_59 = arith.constant 0.000000e+00 : f32
    %103 = vector.broadcast %cst_59 : f32 to vector<1x16xf32>
    %104 = vector.extract_strided_slice %102 {offsets = [0, 0], sizes = [15, 16], strides = [1, 1]} : vector<16x16xf32> to vector<15x16xf32>
    %105 = tpu.concatenate %103, %104 in 0 : vector<1x16xf32>, vector<15x16xf32> -> vector<16x16xf32>
    %cst_60 = arith.constant 0.000000e+00 : f32
    %106 = vector.broadcast %cst_60 : f32 to vector<16x1xf32>
    %107 = vector.extract_strided_slice %105 {offsets = [0, 0], sizes = [16, 15], strides = [1, 1]} : vector<16x16xf32> to vector<16x15xf32>
    %108 = tpu.concatenate %106, %107 in 1 : vector<16x1xf32>, vector<16x15xf32> -> vector<16x16xf32>
    %c1_61 = arith.constant 1 : index
    %c0_62 = arith.constant 0 : index
    %109 = memref.load %arg4[%c1_61, %c0_62] : memref<9x4xf32, #tpu.memory_space<smem>>
    %110 = vector.broadcast %109 : f32 to vector<16x16xf32>
    %111 = arith.mulf %110, %33 : vector<16x16xf32>
    %c1_63 = arith.constant 1 : index
    %c1_64 = arith.constant 1 : index
    %112 = memref.load %arg4[%c1_63, %c1_64] : memref<9x4xf32, #tpu.memory_space<smem>>
    %113 = vector.broadcast %112 : f32 to vector<16x16xf32>
    %114 = arith.mulf %113, %51 : vector<16x16xf32>
    %115 = arith.addf %111, %114 : vector<16x16xf32>
    %c1_65 = arith.constant 1 : index
    %c2_66 = arith.constant 2 : index
    %116 = memref.load %arg4[%c1_65, %c2_66] : memref<9x4xf32, #tpu.memory_space<smem>>
    %117 = vector.broadcast %116 : f32 to vector<16x16xf32>
    %118 = arith.mulf %117, %69 : vector<16x16xf32>
    %119 = arith.addf %115, %118 : vector<16x16xf32>
    %c1_67 = arith.constant 1 : index
    %c3_68 = arith.constant 3 : index
    %120 = memref.load %arg4[%c1_67, %c3_68] : memref<9x4xf32, #tpu.memory_space<smem>>
    %121 = vector.broadcast %120 : f32 to vector<16x16xf32>
    %122 = arith.mulf %121, %87 : vector<16x16xf32>
    %123 = arith.addf %119, %122 : vector<16x16xf32>
    %cst_69 = arith.constant 0.000000e+00 : f32
    %124 = vector.broadcast %cst_69 : f32 to vector<1x16xf32>
    %125 = vector.extract_strided_slice %123 {offsets = [0, 0], sizes = [15, 16], strides = [1, 1]} : vector<16x16xf32> to vector<15x16xf32>
    %126 = tpu.concatenate %124, %125 in 0 : vector<1x16xf32>, vector<15x16xf32> -> vector<16x16xf32>
    %127 = arith.addf %108, %126 : vector<16x16xf32>
    %c2_70 = arith.constant 2 : index
    %c0_71 = arith.constant 0 : index
    %128 = memref.load %arg4[%c2_70, %c0_71] : memref<9x4xf32, #tpu.memory_space<smem>>
    %129 = vector.broadcast %128 : f32 to vector<16x16xf32>
    %130 = arith.mulf %129, %33 : vector<16x16xf32>
    %c2_72 = arith.constant 2 : index
    %c1_73 = arith.constant 1 : index
    %131 = memref.load %arg4[%c2_72, %c1_73] : memref<9x4xf32, #tpu.memory_space<smem>>
    %132 = vector.broadcast %131 : f32 to vector<16x16xf32>
    %133 = arith.mulf %132, %51 : vector<16x16xf32>
    %134 = arith.addf %130, %133 : vector<16x16xf32>
    %c2_74 = arith.constant 2 : index
    %c2_75 = arith.constant 2 : index
    %135 = memref.load %arg4[%c2_74, %c2_75] : memref<9x4xf32, #tpu.memory_space<smem>>
    %136 = vector.broadcast %135 : f32 to vector<16x16xf32>
    %137 = arith.mulf %136, %69 : vector<16x16xf32>
    %138 = arith.addf %134, %137 : vector<16x16xf32>
    %c2_76 = arith.constant 2 : index
    %c3_77 = arith.constant 3 : index
    %139 = memref.load %arg4[%c2_76, %c3_77] : memref<9x4xf32, #tpu.memory_space<smem>>
    %140 = vector.broadcast %139 : f32 to vector<16x16xf32>
    %141 = arith.mulf %140, %87 : vector<16x16xf32>
    %142 = arith.addf %138, %141 : vector<16x16xf32>
    %cst_78 = arith.constant 0.000000e+00 : f32
    %143 = vector.broadcast %cst_78 : f32 to vector<1x16xf32>
    %144 = vector.extract_strided_slice %142 {offsets = [0, 0], sizes = [15, 16], strides = [1, 1]} : vector<16x16xf32> to vector<15x16xf32>
    %145 = tpu.concatenate %143, %144 in 0 : vector<1x16xf32>, vector<15x16xf32> -> vector<16x16xf32>
    %146 = vector.extract_strided_slice %145 {offsets = [0, 1], sizes = [16, 15], strides = [1, 1]} : vector<16x16xf32> to vector<16x15xf32>
    %cst_79 = arith.constant 0.000000e+00 : f32
    %147 = vector.broadcast %cst_79 : f32 to vector<16x1xf32>
    %148 = tpu.concatenate %146, %147 in 1 : vector<16x15xf32>, vector<16x1xf32> -> vector<16x16xf32>
    %149 = arith.addf %127, %148 : vector<16x16xf32>
    %c3_80 = arith.constant 3 : index
    %c0_81 = arith.constant 0 : index
    %150 = memref.load %arg4[%c3_80, %c0_81] : memref<9x4xf32, #tpu.memory_space<smem>>
    %151 = vector.broadcast %150 : f32 to vector<16x16xf32>
    %152 = arith.mulf %151, %33 : vector<16x16xf32>
    %c3_82 = arith.constant 3 : index
    %c1_83 = arith.constant 1 : index
    %153 = memref.load %arg4[%c3_82, %c1_83] : memref<9x4xf32, #tpu.memory_space<smem>>
    %154 = vector.broadcast %153 : f32 to vector<16x16xf32>
    %155 = arith.mulf %154, %51 : vector<16x16xf32>
    %156 = arith.addf %152, %155 : vector<16x16xf32>
    %c3_84 = arith.constant 3 : index
    %c2_85 = arith.constant 2 : index
    %157 = memref.load %arg4[%c3_84, %c2_85] : memref<9x4xf32, #tpu.memory_space<smem>>
    %158 = vector.broadcast %157 : f32 to vector<16x16xf32>
    %159 = arith.mulf %158, %69 : vector<16x16xf32>
    %160 = arith.addf %156, %159 : vector<16x16xf32>
    %c3_86 = arith.constant 3 : index
    %c3_87 = arith.constant 3 : index
    %161 = memref.load %arg4[%c3_86, %c3_87] : memref<9x4xf32, #tpu.memory_space<smem>>
    %162 = vector.broadcast %161 : f32 to vector<16x16xf32>
    %163 = arith.mulf %162, %87 : vector<16x16xf32>
    %164 = arith.addf %160, %163 : vector<16x16xf32>
    %cst_88 = arith.constant 0.000000e+00 : f32
    %165 = vector.broadcast %cst_88 : f32 to vector<16x1xf32>
    %166 = vector.extract_strided_slice %164 {offsets = [0, 0], sizes = [16, 15], strides = [1, 1]} : vector<16x16xf32> to vector<16x15xf32>
    %167 = tpu.concatenate %165, %166 in 1 : vector<16x1xf32>, vector<16x15xf32> -> vector<16x16xf32>
    %168 = arith.addf %149, %167 : vector<16x16xf32>
    %c4 = arith.constant 4 : index
    %c0_89 = arith.constant 0 : index
    %169 = memref.load %arg4[%c4, %c0_89] : memref<9x4xf32, #tpu.memory_space<smem>>
    %170 = vector.broadcast %169 : f32 to vector<16x16xf32>
    %171 = arith.mulf %170, %33 : vector<16x16xf32>
    %c4_90 = arith.constant 4 : index
    %c1_91 = arith.constant 1 : index
    %172 = memref.load %arg4[%c4_90, %c1_91] : memref<9x4xf32, #tpu.memory_space<smem>>
    %173 = vector.broadcast %172 : f32 to vector<16x16xf32>
    %174 = arith.mulf %173, %51 : vector<16x16xf32>
    %175 = arith.addf %171, %174 : vector<16x16xf32>
    %c4_92 = arith.constant 4 : index
    %c2_93 = arith.constant 2 : index
    %176 = memref.load %arg4[%c4_92, %c2_93] : memref<9x4xf32, #tpu.memory_space<smem>>
    %177 = vector.broadcast %176 : f32 to vector<16x16xf32>
    %178 = arith.mulf %177, %69 : vector<16x16xf32>
    %179 = arith.addf %175, %178 : vector<16x16xf32>
    %c4_94 = arith.constant 4 : index
    %c3_95 = arith.constant 3 : index
    %180 = memref.load %arg4[%c4_94, %c3_95] : memref<9x4xf32, #tpu.memory_space<smem>>
    %181 = vector.broadcast %180 : f32 to vector<16x16xf32>
    %182 = arith.mulf %181, %87 : vector<16x16xf32>
    %183 = arith.addf %179, %182 : vector<16x16xf32>
    %184 = arith.addf %168, %183 : vector<16x16xf32>
    %c5 = arith.constant 5 : index
    %c0_96 = arith.constant 0 : index
    %185 = memref.load %arg4[%c5, %c0_96] : memref<9x4xf32, #tpu.memory_space<smem>>
    %186 = vector.broadcast %185 : f32 to vector<16x16xf32>
    %187 = arith.mulf %186, %33 : vector<16x16xf32>
    %c5_97 = arith.constant 5 : index
    %c1_98 = arith.constant 1 : index
    %188 = memref.load %arg4[%c5_97, %c1_98] : memref<9x4xf32, #tpu.memory_space<smem>>
    %189 = vector.broadcast %188 : f32 to vector<16x16xf32>
    %190 = arith.mulf %189, %51 : vector<16x16xf32>
    %191 = arith.addf %187, %190 : vector<16x16xf32>
    %c5_99 = arith.constant 5 : index
    %c2_100 = arith.constant 2 : index
    %192 = memref.load %arg4[%c5_99, %c2_100] : memref<9x4xf32, #tpu.memory_space<smem>>
    %193 = vector.broadcast %192 : f32 to vector<16x16xf32>
    %194 = arith.mulf %193, %69 : vector<16x16xf32>
    %195 = arith.addf %191, %194 : vector<16x16xf32>
    %c5_101 = arith.constant 5 : index
    %c3_102 = arith.constant 3 : index
    %196 = memref.load %arg4[%c5_101, %c3_102] : memref<9x4xf32, #tpu.memory_space<smem>>
    %197 = vector.broadcast %196 : f32 to vector<16x16xf32>
    %198 = arith.mulf %197, %87 : vector<16x16xf32>
    %199 = arith.addf %195, %198 : vector<16x16xf32>
    %200 = vector.extract_strided_slice %199 {offsets = [0, 1], sizes = [16, 15], strides = [1, 1]} : vector<16x16xf32> to vector<16x15xf32>
    %cst_103 = arith.constant 0.000000e+00 : f32
    %201 = vector.broadcast %cst_103 : f32 to vector<16x1xf32>
    %202 = tpu.concatenate %200, %201 in 1 : vector<16x15xf32>, vector<16x1xf32> -> vector<16x16xf32>
    %203 = arith.addf %184, %202 : vector<16x16xf32>
    %c6 = arith.constant 6 : index
    %c0_104 = arith.constant 0 : index
    %204 = memref.load %arg4[%c6, %c0_104] : memref<9x4xf32, #tpu.memory_space<smem>>
    %205 = vector.broadcast %204 : f32 to vector<16x16xf32>
    %206 = arith.mulf %205, %33 : vector<16x16xf32>
    %c6_105 = arith.constant 6 : index
    %c1_106 = arith.constant 1 : index
    %207 = memref.load %arg4[%c6_105, %c1_106] : memref<9x4xf32, #tpu.memory_space<smem>>
    %208 = vector.broadcast %207 : f32 to vector<16x16xf32>
    %209 = arith.mulf %208, %51 : vector<16x16xf32>
    %210 = arith.addf %206, %209 : vector<16x16xf32>
    %c6_107 = arith.constant 6 : index
    %c2_108 = arith.constant 2 : index
    %211 = memref.load %arg4[%c6_107, %c2_108] : memref<9x4xf32, #tpu.memory_space<smem>>
    %212 = vector.broadcast %211 : f32 to vector<16x16xf32>
    %213 = arith.mulf %212, %69 : vector<16x16xf32>
    %214 = arith.addf %210, %213 : vector<16x16xf32>
    %c6_109 = arith.constant 6 : index
    %c3_110 = arith.constant 3 : index
    %215 = memref.load %arg4[%c6_109, %c3_110] : memref<9x4xf32, #tpu.memory_space<smem>>
    %216 = vector.broadcast %215 : f32 to vector<16x16xf32>
    %217 = arith.mulf %216, %87 : vector<16x16xf32>
    %218 = arith.addf %214, %217 : vector<16x16xf32>
    %219 = vector.extract_strided_slice %218 {offsets = [1, 0], sizes = [15, 16], strides = [1, 1]} : vector<16x16xf32> to vector<15x16xf32>
    %cst_111 = arith.constant 0.000000e+00 : f32
    %220 = vector.broadcast %cst_111 : f32 to vector<1x16xf32>
    %221 = tpu.concatenate %219, %220 in 0 : vector<15x16xf32>, vector<1x16xf32> -> vector<16x16xf32>
    %cst_112 = arith.constant 0.000000e+00 : f32
    %222 = vector.broadcast %cst_112 : f32 to vector<16x1xf32>
    %223 = vector.extract_strided_slice %221 {offsets = [0, 0], sizes = [16, 15], strides = [1, 1]} : vector<16x16xf32> to vector<16x15xf32>
    %224 = tpu.concatenate %222, %223 in 1 : vector<16x1xf32>, vector<16x15xf32> -> vector<16x16xf32>
    %225 = arith.addf %203, %224 : vector<16x16xf32>
    %c7 = arith.constant 7 : index
    %c0_113 = arith.constant 0 : index
    %226 = memref.load %arg4[%c7, %c0_113] : memref<9x4xf32, #tpu.memory_space<smem>>
    %227 = vector.broadcast %226 : f32 to vector<16x16xf32>
    %228 = arith.mulf %227, %33 : vector<16x16xf32>
    %c7_114 = arith.constant 7 : index
    %c1_115 = arith.constant 1 : index
    %229 = memref.load %arg4[%c7_114, %c1_115] : memref<9x4xf32, #tpu.memory_space<smem>>
    %230 = vector.broadcast %229 : f32 to vector<16x16xf32>
    %231 = arith.mulf %230, %51 : vector<16x16xf32>
    %232 = arith.addf %228, %231 : vector<16x16xf32>
    %c7_116 = arith.constant 7 : index
    %c2_117 = arith.constant 2 : index
    %233 = memref.load %arg4[%c7_116, %c2_117] : memref<9x4xf32, #tpu.memory_space<smem>>
    %234 = vector.broadcast %233 : f32 to vector<16x16xf32>
    %235 = arith.mulf %234, %69 : vector<16x16xf32>
    %236 = arith.addf %232, %235 : vector<16x16xf32>
    %c7_118 = arith.constant 7 : index
    %c3_119 = arith.constant 3 : index
    %237 = memref.load %arg4[%c7_118, %c3_119] : memref<9x4xf32, #tpu.memory_space<smem>>
    %238 = vector.broadcast %237 : f32 to vector<16x16xf32>
    %239 = arith.mulf %238, %87 : vector<16x16xf32>
    %240 = arith.addf %236, %239 : vector<16x16xf32>
    %241 = vector.extract_strided_slice %240 {offsets = [1, 0], sizes = [15, 16], strides = [1, 1]} : vector<16x16xf32> to vector<15x16xf32>
    %cst_120 = arith.constant 0.000000e+00 : f32
    %242 = vector.broadcast %cst_120 : f32 to vector<1x16xf32>
    %243 = tpu.concatenate %241, %242 in 0 : vector<15x16xf32>, vector<1x16xf32> -> vector<16x16xf32>
    %244 = arith.addf %225, %243 : vector<16x16xf32>
    %c8 = arith.constant 8 : index
    %c0_121 = arith.constant 0 : index
    %245 = memref.load %arg4[%c8, %c0_121] : memref<9x4xf32, #tpu.memory_space<smem>>
    %246 = vector.broadcast %245 : f32 to vector<16x16xf32>
    %247 = arith.mulf %246, %33 : vector<16x16xf32>
    %c8_122 = arith.constant 8 : index
    %c1_123 = arith.constant 1 : index
    %248 = memref.load %arg4[%c8_122, %c1_123] : memref<9x4xf32, #tpu.memory_space<smem>>
    %249 = vector.broadcast %248 : f32 to vector<16x16xf32>
    %250 = arith.mulf %249, %51 : vector<16x16xf32>
    %251 = arith.addf %247, %250 : vector<16x16xf32>
    %c8_124 = arith.constant 8 : index
    %c2_125 = arith.constant 2 : index
    %252 = memref.load %arg4[%c8_124, %c2_125] : memref<9x4xf32, #tpu.memory_space<smem>>
    %253 = vector.broadcast %252 : f32 to vector<16x16xf32>
    %254 = arith.mulf %253, %69 : vector<16x16xf32>
    %255 = arith.addf %251, %254 : vector<16x16xf32>
    %c8_126 = arith.constant 8 : index
    %c3_127 = arith.constant 3 : index
    %256 = memref.load %arg4[%c8_126, %c3_127] : memref<9x4xf32, #tpu.memory_space<smem>>
    %257 = vector.broadcast %256 : f32 to vector<16x16xf32>
    %258 = arith.mulf %257, %87 : vector<16x16xf32>
    %259 = arith.addf %255, %258 : vector<16x16xf32>
    %260 = vector.extract_strided_slice %259 {offsets = [1, 0], sizes = [15, 16], strides = [1, 1]} : vector<16x16xf32> to vector<15x16xf32>
    %cst_128 = arith.constant 0.000000e+00 : f32
    %261 = vector.broadcast %cst_128 : f32 to vector<1x16xf32>
    %262 = tpu.concatenate %260, %261 in 0 : vector<15x16xf32>, vector<1x16xf32> -> vector<16x16xf32>
    %263 = vector.extract_strided_slice %262 {offsets = [0, 1], sizes = [16, 15], strides = [1, 1]} : vector<16x16xf32> to vector<16x15xf32>
    %cst_129 = arith.constant 0.000000e+00 : f32
    %264 = vector.broadcast %cst_129 : f32 to vector<16x1xf32>
    %265 = tpu.concatenate %263, %264 in 1 : vector<16x15xf32>, vector<16x1xf32> -> vector<16x16xf32>
    %266 = arith.addf %244, %265 : vector<16x16xf32>
    %267 = arith.negf %266 : vector<16x16xf32>
    %268 = math.exp %267 : vector<16x16xf32>
    %cst_130 = arith.constant 1.000000e+00 : f32
    %269 = vector.broadcast %cst_130 : f32 to vector<16x16xf32>
    %270 = arith.addf %269, %268 : vector<16x16xf32>
    %271 = arith.divf %269, %270 : vector<16x16xf32>
    %272 = arith.mulf %1, %271 : vector<16x16xf32>
    %c0_131 = arith.constant 0 : index
    %c0_132 = arith.constant 0 : index
    %c0_133 = arith.constant 0 : index
    %c0_134 = arith.constant 0 : index
    %273 = vector.load %arg5[%c0_131, %c0_132, %c0_133, %c0_134] : memref<1x4x16x16xf32, #tpu.memory_space<vmem>>, vector<1x1x16x16xf32>
    %274 = vector.shape_cast %273 : vector<1x1x16x16xf32> to vector<16x16xf32>
    %275 = vector.shape_cast %272 : vector<16x16xf32> to vector<1x1x16x16xf32>
    tpu.vector_store %arg5[%c0_131, %c0_132, %c0_133, %c0_134], %275 {strides = array<i32>} : memref<1x4x16x16xf32, #tpu.memory_space<vmem>>, vector<1x1x16x16xf32>,
    %276 = arith.mulf %3, %271 : vector<16x16xf32>
    %c0_135 = arith.constant 0 : index
    %c1_136 = arith.constant 1 : index
    %c0_137 = arith.constant 0 : index
    %c0_138 = arith.constant 0 : index
    %277 = vector.load %arg5[%c0_135, %c1_136, %c0_137, %c0_138] : memref<1x4x16x16xf32, #tpu.memory_space<vmem>>, vector<1x1x16x16xf32>
    %278 = vector.shape_cast %277 : vector<1x1x16x16xf32> to vector<16x16xf32>
    %279 = vector.shape_cast %276 : vector<16x16xf32> to vector<1x1x16x16xf32>
    tpu.vector_store %arg5[%c0_135, %c1_136, %c0_137, %c0_138], %279 {strides = array<i32>} : memref<1x4x16x16xf32, #tpu.memory_space<vmem>>, vector<1x1x16x16xf32>,
    %280 = arith.mulf %5, %271 : vector<16x16xf32>
    %c0_139 = arith.constant 0 : index
    %c2_140 = arith.constant 2 : index
    %c0_141 = arith.constant 0 : index
    %c0_142 = arith.constant 0 : index
    %281 = vector.load %arg5[%c0_139, %c2_140, %c0_141, %c0_142] : memref<1x4x16x16xf32, #tpu.memory_space<vmem>>, vector<1x1x16x16xf32>
    %282 = vector.shape_cast %281 : vector<1x1x16x16xf32> to vector<16x16xf32>
    %283 = vector.shape_cast %280 : vector<16x16xf32> to vector<1x1x16x16xf32>
    tpu.vector_store %arg5[%c0_139, %c2_140, %c0_141, %c0_142], %283 {strides = array<i32>} : memref<1x4x16x16xf32, #tpu.memory_space<vmem>>, vector<1x1x16x16xf32>,
    %284 = arith.mulf %7, %271 : vector<16x16xf32>
    %c0_143 = arith.constant 0 : index
    %c3_144 = arith.constant 3 : index
    %c0_145 = arith.constant 0 : index
    %c0_146 = arith.constant 0 : index
    %285 = vector.load %arg5[%c0_143, %c3_144, %c0_145, %c0_146] : memref<1x4x16x16xf32, #tpu.memory_space<vmem>>, vector<1x1x16x16xf32>
    %286 = vector.shape_cast %285 : vector<1x1x16x16xf32> to vector<16x16xf32>
    %287 = vector.shape_cast %284 : vector<16x16xf32> to vector<1x1x16x16xf32>
    tpu.vector_store %arg5[%c0_143, %c3_144, %c0_145, %c0_146], %287 {strides = array<i32>} : memref<1x4x16x16xf32, #tpu.memory_space<vmem>>, vector<1x1x16x16xf32>,
    return
  }
  func.func @transform_0(%arg0: i32) -> (i32, i32, i32, i32) {
    %c0_i32 = arith.constant 0 : i32
    %c0_i32_0 = arith.constant 0 : i32
    %c0_i32_1 = arith.constant 0 : i32
    %c0_i32_2 = arith.constant 0 : i32
    return %arg0, %c0_i32, %c0_i32_0, %c0_i32_1 : i32, i32, i32, i32
  }
  func.func @transform_1(%arg0: i32) -> (i32, i32) {
    %c0_i32 = arith.constant 0 : i32
    %c0_i32_0 = arith.constant 0 : i32
    %c0_i32_1 = arith.constant 0 : i32
    return %c0_i32, %c0_i32_0 : i32, i32
  }
  func.func @transform_2(%arg0: i32) -> i32 {
    %c0_i32 = arith.constant 0 : i32
    %c0_i32_0 = arith.constant 0 : i32
    return %c0_i32 : i32
  }
  func.func @transform_3(%arg0: i32) -> (i32, i32) {
    %c0_i32 = arith.constant 0 : i32
    %c0_i32_0 = arith.constant 0 : i32
    %c0_i32_1 = arith.constant 0 : i32
    return %c0_i32, %c0_i32_0 : i32, i32
  }
  func.func @transform_4(%arg0: i32) -> (i32, i32, i32, i32) {
    %c0_i32 = arith.constant 0 : i32
    %c0_i32_0 = arith.constant 0 : i32
    %c0_i32_1 = arith.constant 0 : i32
    %c0_i32_2 = arith.constant 0 : i32
    return %arg0, %c0_i32, %c0_i32_0, %c0_i32_1 : i32, i32, i32, i32
  }
}

</mosaic_0001>

<llo_original>
// kernel: tpu_custom_call.1
$region0: #{tpu_custom_call.1}
  #allocation0 [shape = 'u32[]', space=smem, size = 0x4, offset = 0x4, fixed_abs, tag = 'smem constant byte address 0x4 - core index']
  #allocation1 [shape = 'u32[144,128]{1,0:T(1,128)}', space=vmem, size = 0x12000, scoped, tag = 'internal scratch']
  %s0 = inlined_call_operand.hbm [shape: f32[2,4,16,16], index: 0, kind: input, shape index: {}]
  %s1 = inlined_call_operand.vmem [shape: f32[4,4], index: 1, kind: input, shape index: {}]
  %s2 = inlined_call_operand.vmem [shape: f32[4], index: 2, kind: input, shape index: {}]
  %s3 = inlined_call_operand.vmem [shape: f32[9,4], index: 3, kind: input, shape index: {}]
  %s4 = inlined_call_operand.hbm [shape: f32[2,4,16,16], index: 4, kind: output, shape index: {}]
  %s5 = sld [smem:[#allocation0]]
  $region65: #{tpu_custom_call.1} parent=0
    _
  %s7 = ssub.s32 1, %s5
  %s8 = scalar_select 0, %s7, %s5
  $region1: #{tpu_custom_call.1} parent=0
    #allocation2 [shape = 'u8[65536]{0}', space=vmem, size = 0x10000, scoped, tag = 'input window, operand 0']
    #allocation3 [shape = 's32[2]{0}', space=sflag, size = 0x8, scoped, tag = 'scoped memory for tpu_custom_call.1']
    #allocation4 [shape = 's32[2]{0}', space=sflag, size = 0x8, scoped, tag = 'scoped memory for tpu_custom_call.1']
    #allocation5 [shape = 's32[2]{0}', space=sflag, size = 0x8, scoped, tag = 'scoped memory for tpu_custom_call.1']
    #allocation6 [shape = 'u8[2048]{0}', space=smem, size = 0x800, scoped, tag = 'input window, operand 1, single buffered']
    #allocation7 [shape = 'u8[512]{0}', space=smem, size = 0x200, scoped, tag = 'input window, operand 2, single buffered']
    #allocation8 [shape = 's32[1]{0}', space=sflag, size = 0x4, scoped, tag = 'scoped memory for tpu_custom_call.1']
    #allocation9 [shape = 'u8[8192]{0}', space=smem, size = 0x2000, scoped, tag = 'input window, operand 3, single buffered']
    #allocation10 [shape = 'u8[65536]{0}', space=vmem, size = 0x10000, scoped, tag = 'output window, operand 0']
    %9 = vsyncpa [#allocation3], 0
    %s10 = scalar_lea.sflag [#allocation3], 1
    %11 = vsyncpa %s10, 0
    %12 = vsyncpa [#allocation5], 0
    %13 = vsyncpa [#allocation8], 0
    %14 = vsyncpa [#allocation4], 0
    %s15 = scalar_lea.sflag [#allocation4], 1
    %16 = vsyncpa %s15, 0
    loop: start=0, step=1, limit=4
    $region2: #{tpu_custom_call.1} parent=1 // loop_pre_header
      _
    $region3: #{tpu_custom_call.1} parent=1 // loop_header
      %s18 = sphi 0, %s22
      %p19 = scmp.ge.s32.totalorder %s18, 4
      %s28 = sphi 0, %s30
      %s31 = sphi 0, %s28
      %s32 = sphi 0, %s31
      %s48 = sphi 0, %s32
      %s52 = sphi 0, %s52
      %s54 = sphi 0, %s52
      %s55 = sphi 0, %s54
      %s69 = sphi 0, %s55
      %s73 = sphi 0, %s73
      %s75 = sphi 0, %s73
      %s76 = sphi 0, %s75
      %s90 = sphi 0, %s76
      %s94 = sphi 0, %s94
      %s96 = sphi 0, %s94
      %s97 = sphi 0, %s96
      %s111 = sphi 0, %s97
      %s117 = sphi 0, %s119
      %s120 = sphi 0, %s117
      %s121 = sphi 0, %s120
      %s137 = sphi 0, %s121
    $region4: #{tpu_custom_call.1} parent=1 // loop_header_branch
      %21 = sbr.rel (%p19) target = $region8
    $region5: #{tpu_custom_call.1} parent=1 // loop_body
      %s23 = ssub.s32 %s18, 1
      %s24 = ssub.s32 %s18, 2
      %s25 = sadd.s32 %s18, 1
      %s26 = ssub.s32 %s18, %s25
      %p27 = scmp.eq.s32.totalorder %s26, 0
      %s29 = sadd.s32 %s28, 1
      %s30 = scalar_select %p27, %s28, %s29
      %p33 = pneg %p27
      %p34 = scmp.eq.s32.totalorder %s18, 1
      %p35 = por %p33, %p34
      %p36 = scmp.ne.s32.totalorder %s28, %s31
      %p37 = scmp.eq.s32.totalorder %s18, 0
      %p38 = por %p36, %p37
      %p39 = scmp.ne.s32.totalorder %s28, %s31
      %p40 = scmp.eq.s32.totalorder %s23, 1
      %p41 = por %p39, %p40
      %p42 = scmp.ne.s32.totalorder %s31, %s32
      %p43 = scmp.eq.s32.totalorder %s23, 0
      %p44 = por %p42, %p43
      %p45 = scmp.ne.s32.totalorder %s31, %s32
      %p46 = scmp.eq.s32.totalorder %s24, 1
      %p47 = por %p45, %p46
      %p49 = scmp.ne.s32.totalorder %s32, %s48
      %p50 = scmp.eq.s32.totalorder %s24, 0
      %p51 = por %p49, %p50
      %s53 = sadd.s32 %s52, 1
      %p56 = scmp.eq.s32.totalorder %s18, 1
      %p57 = scmp.ne.s32.totalorder %s52, %s54
      %p58 = scmp.eq.s32.totalorder %s18, 0
      %p59 = por %p57, %p58
      %p60 = scmp.ne.s32.totalorder %s52, %s54
      %p61 = scmp.eq.s32.totalorder %s23, 1
      %p62 = por %p60, %p61
      %p63 = scmp.ne.s32.totalorder %s54, %s55
      %p64 = scmp.eq.s32.totalorder %s23, 0
      %p65 = por %p63, %p64
      %p66 = scmp.ne.s32.totalorder %s54, %s55
      %p67 = scmp.eq.s32.totalorder %s24, 1
      %p68 = por %p66, %p67
      %p70 = scmp.ne.s32.totalorder %s55, %s69
      %p71 = scmp.eq.s32.totalorder %s24, 0
      %p72 = por %p70, %p71
      %s74 = sadd.s32 %s73, 1
      %p77 = scmp.eq.s32.totalorder %s18, 1
      %p78 = scmp.ne.s32.totalorder %s73, %s75
      %p79 = scmp.eq.s32.totalorder %s18, 0
      %p80 = por %p78, %p79
      %p81 = scmp.ne.s32.totalorder %s73, %s75
      %p82 = scmp.eq.s32.totalorder %s23, 1
      %p83 = por %p81, %p82
      %p84 = scmp.ne.s32.totalorder %s75, %s76
      %p85 = scmp.eq.s32.totalorder %s23, 0
      %p86 = por %p84, %p85
      %p87 = scmp.ne.s32.totalorder %s75, %s76
      %p88 = scmp.eq.s32.totalorder %s24, 1
      %p89 = por %p87, %p88
      %p91 = scmp.ne.s32.totalorder %s76, %s90
      %p92 = scmp.eq.s32.totalorder %s24, 0
      %p93 = por %p91, %p92
      %s95 = sadd.s32 %s94, 1
      %p98 = scmp.eq.s32.totalorder %s18, 1
      %p99 = scmp.ne.s32.totalorder %s94, %s96
      %p100 = scmp.eq.s32.totalorder %s18, 0
      %p101 = por %p99, %p100
      %p102 = scmp.ne.s32.totalorder %s94, %s96
      %p103 = scmp.eq.s32.totalorder %s23, 1
      %p104 = por %p102, %p103
      %p105 = scmp.ne.s32.totalorder %s96, %s97
      %p106 = scmp.eq.s32.totalorder %s23, 0
      %p107 = por %p105, %p106
      %p108 = scmp.ne.s32.totalorder %s96, %s97
      %p109 = scmp.eq.s32.totalorder %s24, 1
      %p110 = por %p108, %p109
      %p112 = scmp.ne.s32.totalorder %s97, %s111
      %p113 = scmp.eq.s32.totalorder %s24, 0
      %p114 = por %p112, %p113
      %s115 = ssub.s32 %s18, %s25
      %p116 = scmp.eq.s32.totalorder %s115, 0
      %s118 = sadd.s32 %s117, 1
      %s119 = scalar_select %p116, %s117, %s118
      %p122 = pneg %p116
      %p123 = scmp.eq.s32.totalorder %s18, 1
      %p124 = por %p122, %p123
      %p125 = scmp.ne.s32.totalorder %s117, %s120
      %p126 = scmp.eq.s32.totalorder %s18, 0
      %p127 = por %p125, %p126
      %p128 = scmp.ne.s32.totalorder %s117, %s120
      %p129 = scmp.eq.s32.totalorder %s23, 1
      %p130 = por %p128, %p129
      %p131 = scmp.ne.s32.totalorder %s120, %s121
      %p132 = scmp.eq.s32.totalorder %s23, 0
      %p133 = por %p131, %p132
      %p134 = scmp.ne.s32.totalorder %s120, %s121
      %p135 = scmp.eq.s32.totalorder %s24, 1
      %p136 = por %p134, %p135
      %p138 = scmp.ne.s32.totalorder %s121, %s137
      %p139 = scmp.eq.s32.totalorder %s24, 0
      %p140 = por %p138, %p139
      %p141 = scmp.le.s32.totalorder 1, %s18
      %p142 = scmp.lt.s32.totalorder %s18, 3
      %p143 = pnand %p141, %p142
      %p144 = pneg %p143
      // Predicated region
      $region9: #{tpu_custom_call.1} parent=5 // pred_check
        _
      $region10: #{tpu_custom_call.1} parent=5 // pred_check_branch
        %146 = sbr.rel (%p143) target = $region12
      $region11: #{tpu_custom_call.1} parent=5 // pred_region
        %s147 = ssub.s32 %s18, 1
        // Predicated region
        $region13: #{tpu_custom_call.1} parent=11 // pred_check
          %p148 = pneg %p65
        $region14: #{tpu_custom_call.1} parent=11 // pred_check_branch
          %150 = sbr.rel (%p148) target = $region16
        $region15: #{tpu_custom_call.1} parent=11 // pred_region
          %s152 = ssub.s32 64, 64
          %153 = vsyncadd [#allocation5], %s152
          %s155 = sshll.u32 %s1, 4
          %s156 = int_to_ptr.vmem [resolvable:$true] %s155
          %158 = dma.vmem_to_smem %s156, 64, [#allocation6], [#allocation5]
        $region16: #{tpu_custom_call.1} parent=11 // pred_fallthru
          _
        // Predicated region
        $region17: #{tpu_custom_call.1} parent=11 // pred_check
          %p159 = pneg %p86
        $region18: #{tpu_custom_call.1} parent=11 // pred_check_branch
          %161 = sbr.rel (%p159) target = $region20
        $region19: #{tpu_custom_call.1} parent=11 // pred_region
          %s163 = ssub.s32 16, 16
          %164 = vsyncadd [#allocation8], %s163
          %s166 = sshll.u32 %s2, 4
          %s167 = int_to_ptr.vmem [resolvable:$true] %s166
          %169 = dma.vmem_to_smem %s167, 16, [#allocation7], [#allocation8]
        $region20: #{tpu_custom_call.1} parent=11 // pred_fallthru
          _
        // Predicated region
        $region21: #{tpu_custom_call.1} parent=11 // pred_check
          %p170 = pneg %p107
        $region22: #{tpu_custom_call.1} parent=11 // pred_check_branch
          %172 = sbr.rel (%p170) target = $region24
        $region23: #{tpu_custom_call.1} parent=11 // pred_region
          %s174 = ssub.s32 256, 256
          %175 = vsyncadd [#allocation8], %s174
          %s176 = sshll.u32 %s3, 4
          %s177 = int_to_ptr.vmem [resolvable:$true] %s176
          %182 = dma.vmem_to_smem %s177, 256, [#allocation9], [#allocation8], 128, 128, 8
        $region24: #{tpu_custom_call.1} parent=11 // pred_fallthru
          _
      $region12: #{tpu_custom_call.1} parent=5 // pred_fallthru
        _
      %p183 = scmp.lt.s32.totalorder %s18, 2
      // Predicated region
      $region25: #{tpu_custom_call.1} parent=5 // pred_check
        %p184 = pneg %p183
      $region26: #{tpu_custom_call.1} parent=5 // pred_check_branch
        %186 = sbr.rel (%p184) target = $region28
      $region27: #{tpu_custom_call.1} parent=5 // pred_region
        // Predicated region
        $region29: #{tpu_custom_call.1} parent=27 // pred_check
          %p187 = pneg %p38
        $region30: #{tpu_custom_call.1} parent=27 // pred_check_branch
          %189 = sbr.rel (%p187) target = $region32
        $region31: #{tpu_custom_call.1} parent=27 // pred_region
          %s190 = sand.u32 %s28, 1
          %s191 = scalar_lea.sflag [#allocation3], %s190
          %s192 = sand.u32 %s28, 1
          %s193 = smul.addr %s192, 64
          %s194 = scalar_lea.vmem [#allocation2], %s193
          %s196 = ssub.s32 1024, 1024
          %197 = vsyncadd %s191, %s196
          %s198 = smul.addr %s18, 8
          %s199 = smul.addr %s198, 128
          %s200 = scalar_lea.hbm %s0, %s199
          %s201 = sshll.u32 %s194, 4
          %s202 = int_to_ptr.vmem [resolvable:$true] %s201
          %207 = dma.hbm_to_vmem [thread:$0]  %s200, 1024, %s202, %s191, 128, 128, 8
        $region32: #{tpu_custom_call.1} parent=27 // pred_fallthru
          _
      $region28: #{tpu_custom_call.1} parent=5 // pred_fallthru
        _
      %p208 = scmp.le.s32.totalorder 1, %s18
      %p209 = scmp.lt.s32.totalorder %s18, 3
      %p210 = pnand %p208, %p209
      %p211 = pneg %p210
      // Predicated region
      $region33: #{tpu_custom_call.1} parent=5 // pred_check
        _
      $region34: #{tpu_custom_call.1} parent=5 // pred_check_branch
        %213 = sbr.rel (%p210) target = $region36
      $region35: #{tpu_custom_call.1} parent=5 // pred_region
        %s214 = ssub.s32 %s18, 1
        %s215 = sand.u32 %s31, 1
        %s216 = scalar_lea.sflag [#allocation3], %s215
        %s217 = sand.u32 %s31, 1
        %s218 = smul.addr %s217, 64
        %s219 = scalar_lea.vmem [#allocation2], %s218
        // Predicated region
        $region37: #{tpu_custom_call.1} parent=35 // pred_check
          %p220 = pneg %p44
        $region38: #{tpu_custom_call.1} parent=35 // pred_check_branch
          %222 = sbr.rel (%p220) target = $region40
        $region39: #{tpu_custom_call.1} parent=35 // pred_region
          %223 = dma.done %s216, 1024
        $region40: #{tpu_custom_call.1} parent=35 // pred_fallthru
          _
        // Predicated region
        $region41: #{tpu_custom_call.1} parent=35 // pred_check
          %p224 = pneg %p65
        $region42: #{tpu_custom_call.1} parent=35 // pred_check_branch
          %226 = sbr.rel (%p224) target = $region44
        $region43: #{tpu_custom_call.1} parent=35 // pred_region
          %227 = dma.done [#allocation5], 64
        $region44: #{tpu_custom_call.1} parent=35 // pred_fallthru
          _
        // Predicated region
        $region45: #{tpu_custom_call.1} parent=35 // pred_check
          %p228 = pneg %p86
        $region46: #{tpu_custom_call.1} parent=35 // pred_check_branch
          %230 = sbr.rel (%p228) target = $region48
        $region47: #{tpu_custom_call.1} parent=35 // pred_region
          %231 = dma.done [#allocation8], 16
        $region48: #{tpu_custom_call.1} parent=35 // pred_fallthru
          _
        // Predicated region
        $region49: #{tpu_custom_call.1} parent=35 // pred_check
          %p232 = pneg %p107
        $region50: #{tpu_custom_call.1} parent=35 // pred_check_branch
          %234 = sbr.rel (%p232) target = $region52
        $region51: #{tpu_custom_call.1} parent=35 // pred_region
          %235 = dma.done [#allocation8], 256
        $region52: #{tpu_custom_call.1} parent=35 // pred_fallthru
          _
        %236 = sfence
        %s237 = sand.u32 %s31, 1
        %s238 = scalar_lea.sflag [#allocation3], %s237
        %s239 = sand.u32 %s31, 1
        %s240 = smul.addr %s239, 64
        %s241 = scalar_lea.vmem [#allocation2], %s240
        %p242 = pneg %p44
        %p243 = pneg %p41
        %p244 = pneg %p65
        %p245 = pneg %p62
        %p246 = pneg %p86
        %p247 = pneg %p83
        %p248 = pneg %p107
        %p249 = pneg %p104
        %p250 = pneg %p133
        %p251 = pneg %p130
        %s252 = sand.u32 %s120, 1
        %s253 = scalar_lea.sflag [#allocation4], %s252
        %s254 = sand.u32 %s120, 1
        %s255 = smul.addr %s254, 64
        %s256 = scalar_lea.vmem [#allocation10], %s255
        %v257 = vld [vmem:[%s219] sm:$0xff]
        %v258 = vld [vmem:[%s219 + $0x8] sm:$0xff]
        %s259 = scalar_lea.vmem %s219, 16 [#allocation2]
        %v260 = vld [vmem:[%s259] sm:$0xff]
        %v261 = vld [vmem:[%s259 + $0x8] sm:$0xff]
        %s262 = scalar_lea.vmem %s219, 32 [#allocation2]
        %v263 = vld [vmem:[%s262] sm:$0xff]
        %v264 = vld [vmem:[%s262 + $0x8] sm:$0xff]
        %s265 = scalar_lea.vmem %s219, 48 [#allocation2]
        %v266 = vld [vmem:[%s265] sm:$0xff]
        %v267 = vld [vmem:[%s265 + $0x8] sm:$0xff]
        %v268 = vmax.f32 %v257, 0.0
        %v269 = vmax.f32 %v258, 0.0
        %v270 = vmax.f32 %v260, 0.0
        %v271 = vmax.f32 %v261, 0.0
        %v272 = vmax.f32 %v263, 0.0
        %v273 = vmax.f32 %v264, 0.0
        %v274 = vmax.f32 %v266, 0.0
        %v275 = vmax.f32 %v267, 0.0
        %s276 = sld [smem:[#allocation7]]
        %s277 = sld [smem:[#allocation6]]
        %v278 = vstv %s277
        %v279 = vmul.f32 %v278, %v268
        %v280 = vmul.f32 %v278, %v269
        %v281 = vstv %s276
        %v282 = vadd.f32 %v281, %v279
        %v283 = vadd.f32 %v281, %v280
        %s284 = sld [smem:[#allocation6 + $0x80]]
        %v285 = vstv %s284
        %v286 = vmul.f32 %v285, %v270
        %v287 = vmul.f32 %v285, %v271
        %v288 = vadd.f32 %v282, %v286
        %v289 = vadd.f32 %v283, %v287
        %s290 = sld [smem:[#allocation6 + $0x100]]
        %v291 = vstv %s290
        %v292 = vmul.f32 %v291, %v272
        %v293 = vmul.f32 %v291, %v273
        %v294 = vadd.f32 %v288, %v292
        %v295 = vadd.f32 %v289, %v293
        %s296 = sld [smem:[#allocation6 + $0x180]]
        %v297 = vstv %s296
        %v298 = vmul.f32 %v297, %v274
        %v299 = vmul.f32 %v297, %v275
        %v300 = vadd.f32 %v294, %v298
        %v301 = vadd.f32 %v295, %v299
        %s302 = sld [smem:[#allocation7 + $0x1]]
        %s303 = sld [smem:[#allocation6 + $0x1]]
        %v304 = vstv %s303
        %v305 = vmul.f32 %v304, %v268
        %v306 = vmul.f32 %v304, %v269
        %v307 = vstv %s302
        %v308 = vadd.f32 %v307, %v305
        %v309 = vadd.f32 %v307, %v306
        %s310 = sld [smem:[#allocation6 + $0x81]]
        %v311 = vstv %s310
        %v312 = vmul.f32 %v311, %v270
        %v313 = vmul.f32 %v311, %v271
        %v314 = vadd.f32 %v308, %v312
        %v315 = vadd.f32 %v309, %v313
        %s316 = sld [smem:[#allocation6 + $0x101]]
        %v317 = vstv %s316
        %v318 = vmul.f32 %v317, %v272
        %v319 = vmul.f32 %v317, %v273
        %v320 = vadd.f32 %v314, %v318
        %v321 = vadd.f32 %v315, %v319
        %s322 = sld [smem:[#allocation6 + $0x181]]
        %v323 = vstv %s322
        %v324 = vmul.f32 %v323, %v274
        %v325 = vmul.f32 %v323, %v275
        %v326 = vadd.f32 %v320, %v324
        %v327 = vadd.f32 %v321, %v325
        %s328 = sld [smem:[#allocation7 + $0x2]]
        %s329 = sld [smem:[#allocation6 + $0x2]]
        %v330 = vstv %s329
        %v331 = vmul.f32 %v330, %v268
        %v332 = vmul.f32 %v330, %v269
        %v333 = vstv %s328
        %v334 = vadd.f32 %v333, %v331
        %v335 = vadd.f32 %v333, %v332
        %s336 = sld [smem:[#allocation6 + $0x82]]
        %v337 = vstv %s336
        %v338 = vmul.f32 %v337, %v270
        %v339 = vmul.f32 %v337, %v271
        %v340 = vadd.f32 %v334, %v338
        %v341 = vadd.f32 %v335, %v339
        %s342 = sld [smem:[#allocation6 + $0x102]]
        %v343 = vstv %s342
        %v344 = vmul.f32 %v343, %v272
        %v345 = vmul.f32 %v343, %v273
        %v346 = vadd.f32 %v340, %v344
        %v347 = vadd.f32 %v341, %v345
        %s348 = sld [smem:[#allocation6 + $0x182]]
        %v349 = vstv %s348
        %v350 = vmul.f32 %v349, %v274
        %v351 = vmul.f32 %v349, %v275
        %v352 = vadd.f32 %v346, %v350
        %v353 = vadd.f32 %v347, %v351
        %s354 = sld [smem:[#allocation7 + $0x3]]
        %s355 = sld [smem:[#allocation6 + $0x3]]
        %v356 = vstv %s355
        %v357 = vmul.f32 %v356, %v268
        %v358 = vmul.f32 %v356, %v269
        %v359 = vstv %s354
        %v360 = vadd.f32 %v359, %v357
        %v361 = vadd.f32 %v359, %v358
        %s362 = sld [smem:[#allocation6 + $0x83]]
        %v363 = vstv %s362
        %v364 = vmul.f32 %v363, %v270
        %v365 = vmul.f32 %v363, %v271
        %v366 = vadd.f32 %v360, %v364
        %v367 = vadd.f32 %v361, %v365
        %s368 = sld [smem:[#allocation6 + $0x103]]
        %v369 = vstv %s368
        %v370 = vmul.f32 %v369, %v272
        %v371 = vmul.f32 %v369, %v273
        %v372 = vadd.f32 %v366, %v370
        %v373 = vadd.f32 %v367, %v371
        %s374 = sld [smem:[#allocation6 + $0x183]]
        %v375 = vstv %s374
        %v376 = vmul.f32 %v375, %v274
        %v377 = vmul.f32 %v375, %v275
        %v378 = vadd.f32 %v372, %v376
        %v379 = vadd.f32 %v373, %v377
        %s380 = sld [smem:[#allocation9]]
        %v381 = vstv %s380
        %v382 = vmul.f32 %v381, %v300
        %v383 = vmul.f32 %v381, %v301
        %s384 = sld [smem:[#allocation9 + $0x1]]
        %v385 = vstv %s384
        %v386 = vmul.f32 %v385, %v326
        %v387 = vmul.f32 %v385, %v327
        %v388 = vadd.f32 %v382, %v386
        %v389 = vadd.f32 %v383, %v387
        %s390 = sld [smem:[#allocation9 + $0x2]]
        %v391 = vstv %s390
        %v392 = vmul.f32 %v391, %v352
        %v393 = vmul.f32 %v391, %v353
        %v394 = vadd.f32 %v388, %v392
        %v395 = vadd.f32 %v389, %v393
        %s396 = sld [smem:[#allocation9 + $0x3]]
        %v397 = vstv %s396
        %v398 = vmul.f32 %v397, %v378
        %v399 = vmul.f32 %v397, %v379
        %v400 = vadd.f32 %v394, %v398
        %v401 = vadd.f32 %v395, %v399
        %vm404 = vcmask 1040384
        %v405 = vrot.slane %v400, 7
        %v406 = vrot.slane %v401, 7
        %v407 = vsel %vm404, %v405, %v406
        %v409 = vsel %vm404, 0.0, %v405
        %411 = vrot.lane.b32.xlu0 %v409, 1
        %v412 = vpop.permute.xlu0 %411
        %413 = vrot.lane.b32.xlu0 %v407, 1
        %v414 = vpop.permute.xlu0 %413
        %vm417 = vcmask 7168
        %v418 = vsel %vm417, 0.0, %v412
        %v419 = vsel %vm417, 0.0, %v414
        %s420 = sld [smem:[#allocation9 + $0x80]]
        %v421 = vstv %s420
        %v422 = vmul.f32 %v421, %v300
        %v423 = vmul.f32 %v421, %v301
        %s424 = sld [smem:[#allocation9 + $0x81]]
        %v425 = vstv %s424
        %v426 = vmul.f32 %v425, %v326
        %v427 = vmul.f32 %v425, %v327
        %v428 = vadd.f32 %v422, %v426
        %v429 = vadd.f32 %v423, %v427
        %s430 = sld [smem:[#allocation9 + $0x82]]
        %v431 = vstv %s430
        %v432 = vmul.f32 %v431, %v352
        %v433 = vmul.f32 %v431, %v353
        %v434 = vadd.f32 %v428, %v432
        %v435 = vadd.f32 %v429, %v433
        %s436 = sld [smem:[#allocation9 + $0x83]]
        %v437 = vstv %s436
        %v438 = vmul.f32 %v437, %v378
        %v439 = vmul.f32 %v437, %v379
        %v440 = vadd.f32 %v434, %v438
        %v441 = vadd.f32 %v435, %v439
        %v444 = vrot.slane %v440, 7
        %v445 = vrot.slane %v441, 7
        %v446 = vsel %vm404, %v444, %v445
        %v449 = vsel %vm404, 0.0, %v444
        %v450 = vadd.f32 %v418, %v449
        %v451 = vadd.f32 %v419, %v446
        %s452 = sld [smem:[#allocation9 + $0x100]]
        %v453 = vstv %s452
        %v454 = vmul.f32 %v453, %v300
        %v455 = vmul.f32 %v453, %v301
        %s456 = sld [smem:[#allocation9 + $0x101]]
        %v457 = vstv %s456
        %v458 = vmul.f32 %v457, %v326
        %v459 = vmul.f32 %v457, %v327
        %v460 = vadd.f32 %v454, %v458
        %v461 = vadd.f32 %v455, %v459
        %s462 = sld [smem:[#allocation9 + $0x102]]
        %v463 = vstv %s462
        %v464 = vmul.f32 %v463, %v352
        %v465 = vmul.f32 %v463, %v353
        %v466 = vadd.f32 %v460, %v464
        %v467 = vadd.f32 %v461, %v465
        %s468 = sld [smem:[#allocation9 + $0x103]]
        %v469 = vstv %s468
        %v470 = vmul.f32 %v469, %v378
        %v471 = vmul.f32 %v469, %v379
        %v472 = vadd.f32 %v466, %v470
        %v473 = vadd.f32 %v467, %v471
        %v476 = vrot.slane %v472, 7
        %v477 = vrot.slane %v473, 7
        %v478 = vsel %vm404, %v476, %v477
        %v480 = vsel %vm404, 0.0, %v476
        %482 = vrot.lane.b32.xlu0 %v480, 127
        %v483 = vpop.permute.xlu0 %482
        %484 = vrot.lane.b32.xlu0 %v478, 127
        %v485 = vpop.permute.xlu0 %484
        %vm488 = vcmask 121856
        %v489 = vsel %vm488, %v483, 0.0
        %v490 = vsel %vm488, %v485, 0.0
        %v491 = vadd.f32 %v450, %v489
        %v492 = vadd.f32 %v451, %v490
        %s493 = sld [smem:[#allocation9 + $0x180]]
        %v494 = vstv %s493
        %v495 = vmul.f32 %v494, %v300
        %v496 = vmul.f32 %v494, %v301
        %s497 = sld [smem:[#allocation9 + $0x181]]
        %v498 = vstv %s497
        %v499 = vmul.f32 %v498, %v326
        %v500 = vmul.f32 %v498, %v327
        %v501 = vadd.f32 %v495, %v499
        %v502 = vadd.f32 %v496, %v500
        %s503 = sld [smem:[#allocation9 + $0x182]]
        %v504 = vstv %s503
        %v505 = vmul.f32 %v504, %v352
        %v506 = vmul.f32 %v504, %v353
        %v507 = vadd.f32 %v501, %v505
        %v508 = vadd.f32 %v502, %v506
        %s509 = sld [smem:[#allocation9 + $0x183]]
        %v510 = vstv %s509
        %v511 = vmul.f32 %v510, %v378
        %v512 = vmul.f32 %v510, %v379
        %v513 = vadd.f32 %v507, %v511
        %v514 = vadd.f32 %v508, %v512
        %517 = vrot.lane.b32.xlu0 %v513, 1
        %v518 = vpop.permute.xlu0 %517
        %519 = vrot.lane.b32.xlu0 %v514, 1
        %v520 = vpop.permute.xlu0 %519
        %v523 = vsel %vm417, 0.0, %v518
        %v524 = vsel %vm417, 0.0, %v520
        %v525 = vadd.f32 %v491, %v523
        %v526 = vadd.f32 %v492, %v524
        %s527 = sld [smem:[#allocation9 + $0x200]]
        %v528 = vstv %s527
        %v529 = vmul.f32 %v528, %v300
        %v530 = vmul.f32 %v528, %v301
        %s531 = sld [smem:[#allocation9 + $0x201]]
        %v532 = vstv %s531
        %v533 = vmul.f32 %v532, %v326
        %v534 = vmul.f32 %v532, %v327
        %v535 = vadd.f32 %v529, %v533
        %v536 = vadd.f32 %v530, %v534
        %s537 = sld [smem:[#allocation9 + $0x202]]
        %v538 = vstv %s537
        %v539 = vmul.f32 %v538, %v352
        %v540 = vmul.f32 %v538, %v353
        %v541 = vadd.f32 %v535, %v539
        %v542 = vadd.f32 %v536, %v540
        %s543 = sld [smem:[#allocation9 + $0x203]]
        %v544 = vstv %s543
        %v545 = vmul.f32 %v544, %v378
        %v546 = vmul.f32 %v544, %v379
        %v547 = vadd.f32 %v541, %v545
        %v548 = vadd.f32 %v542, %v546
        %v549 = vadd.f32 %v525, %v547
        %v550 = vadd.f32 %v526, %v548
        %s551 = sld [smem:[#allocation9 + $0x280]]
        %v552 = vstv %s551
        %v553 = vmul.f32 %v552, %v300
        %v554 = vmul.f32 %v552, %v301
        %s555 = sld [smem:[#allocation9 + $0x281]]
        %v556 = vstv %s555
        %v557 = vmul.f32 %v556, %v326
        %v558 = vmul.f32 %v556, %v327
        %v559 = vadd.f32 %v553, %v557
        %v560 = vadd.f32 %v554, %v558
        %s561 = sld [smem:[#allocation9 + $0x282]]
        %v562 = vstv %s561
        %v563 = vmul.f32 %v562, %v352
        %v564 = vmul.f32 %v562, %v353
        %v565 = vadd.f32 %v559, %v563
        %v566 = vadd.f32 %v560, %v564
        %s567 = sld [smem:[#allocation9 + $0x283]]
        %v568 = vstv %s567
        %v569 = vmul.f32 %v568, %v378
        %v570 = vmul.f32 %v568, %v379
        %v571 = vadd.f32 %v565, %v569
        %v572 = vadd.f32 %v566, %v570
        %575 = vrot.lane.b32.xlu0 %v571, 127
        %v576 = vpop.permute.xlu0 %575
        %577 = vrot.lane.b32.xlu0 %v572, 127
        %v578 = vpop.permute.xlu0 %577
        %v581 = vsel %vm488, %v576, 0.0
        %v582 = vsel %vm488, %v578, 0.0
        %v583 = vadd.f32 %v549, %v581
        %v584 = vadd.f32 %v550, %v582
        %s585 = sld [smem:[#allocation9 + $0x300]]
        %v586 = vstv %s585
        %v587 = vmul.f32 %v586, %v300
        %v588 = vmul.f32 %v586, %v301
        %s589 = sld [smem:[#allocation9 + $0x301]]
        %v590 = vstv %s589
        %v591 = vmul.f32 %v590, %v326
        %v592 = vmul.f32 %v590, %v327
        %v593 = vadd.f32 %v587, %v591
        %v594 = vadd.f32 %v588, %v592
        %s595 = sld [smem:[#allocation9 + $0x302]]
        %v596 = vstv %s595
        %v597 = vmul.f32 %v596, %v352
        %v598 = vmul.f32 %v596, %v353
        %v599 = vadd.f32 %v593, %v597
        %v600 = vadd.f32 %v594, %v598
        %s601 = sld [smem:[#allocation9 + $0x303]]
        %v602 = vstv %s601
        %v603 = vmul.f32 %v602, %v378
        %v604 = vmul.f32 %v602, %v379
        %v605 = vadd.f32 %v599, %v603
        %v606 = vadd.f32 %v600, %v604
        %vm609 = vcmask 1046528
        %v610 = vrot.slane %v605, 1
        %v611 = vrot.slane %v606, 1
        %v612 = vsel %vm609, %v610, %v611
        %v614 = vsel %vm609, %v611, 0.0
        %616 = vrot.lane.b32.xlu0 %v612, 1
        %v617 = vpop.permute.xlu0 %616
        %618 = vrot.lane.b32.xlu0 %v614, 1
        %v619 = vpop.permute.xlu0 %618
        %v622 = vsel %vm417, 0.0, %v617
        %v623 = vsel %vm417, 0.0, %v619
        %v624 = vadd.f32 %v583, %v622
        %v625 = vadd.f32 %v584, %v623
        %s626 = sld [smem:[#allocation9 + $0x380]]
        %v627 = vstv %s626
        %v628 = vmul.f32 %v627, %v300
        %v629 = vmul.f32 %v627, %v301
        %s630 = sld [smem:[#allocation9 + $0x381]]
        %v631 = vstv %s630
        %v632 = vmul.f32 %v631, %v326
        %v633 = vmul.f32 %v631, %v327
        %v634 = vadd.f32 %v628, %v632
        %v635 = vadd.f32 %v629, %v633
        %s636 = sld [smem:[#allocation9 + $0x382]]
        %v637 = vstv %s636
        %v638 = vmul.f32 %v637, %v352
        %v639 = vmul.f32 %v637, %v353
        %v640 = vadd.f32 %v634, %v638
        %v641 = vadd.f32 %v635, %v639
        %s642 = sld [smem:[#allocation9 + $0x383]]
        %v643 = vstv %s642
        %v644 = vmul.f32 %v643, %v378
        %v645 = vmul.f32 %v643, %v379
        %v646 = vadd.f32 %v640, %v644
        %v647 = vadd.f32 %v641, %v645
        %v650 = vrot.slane %v646, 1
        %v651 = vrot.slane %v647, 1
        %v652 = vsel %vm609, %v650, %v651
        %v655 = vsel %vm609, %v651, 0.0
        %v656 = vadd.f32 %v624, %v652
        %v657 = vadd.f32 %v625, %v655
        %s658 = sld [smem:[#allocation9 + $0x400]]
        %v659 = vstv %s658
        %v660 = vmul.f32 %v659, %v300
        %v661 = vmul.f32 %v659, %v301
        %s662 = sld [smem:[#allocation9 + $0x401]]
        %v663 = vstv %s662
        %v664 = vmul.f32 %v663, %v326
        %v665 = vmul.f32 %v663, %v327
        %v666 = vadd.f32 %v660, %v664
        %v667 = vadd.f32 %v661, %v665
        %s668 = sld [smem:[#allocation9 + $0x402]]
        %v669 = vstv %s668
        %v670 = vmul.f32 %v669, %v352
        %v671 = vmul.f32 %v669, %v353
        %v672 = vadd.f32 %v666, %v670
        %v673 = vadd.f32 %v667, %v671
        %s674 = sld [smem:[#allocation9 + $0x403]]
        %v675 = vstv %s674
        %v676 = vmul.f32 %v675, %v378
        %v677 = vmul.f32 %v675, %v379
        %v678 = vadd.f32 %v672, %v676
        %v679 = vadd.f32 %v673, %v677
        %v682 = vrot.slane %v678, 1
        %v683 = vrot.slane %v679, 1
        %v684 = vsel %vm609, %v682, %v683
        %v686 = vsel %vm609, %v683, 0.0
        %688 = vrot.lane.b32.xlu0 %v684, 127
        %v689 = vpop.permute.xlu0 %688
        %690 = vrot.lane.b32.xlu0 %v686, 127
        %v691 = vpop.permute.xlu0 %690
        %v694 = vsel %vm488, %v689, 0.0
        %v695 = vsel %vm488, %v691, 0.0
        %v696 = vadd.f32 %v656, %v694
        %v697 = vadd.f32 %v657, %v695
        %v698 = vxor.u32 %v696, 2147483648
        %v699 = vxor.u32 %v697, 2147483648
        %v700 = vmul.f32 %v698, 1.442695
        %v701 = vpow.pop %v700
        %v702 = vmul.f32 %v699, 1.442695
        %v703 = vpow.pop %v702
        %v704 = vadd.f32 %v701, 1.0
        %v705 = vadd.f32 %v703, 1.0
        %v706 = vrcp.pop %v704
        %v707 = vmul.f32 1.0, %v706
        %v708 = vrcp.pop %v705
        %v709 = vmul.f32 1.0, %v708
        %v710 = vmul.f32 %v257, %v707
        %v711 = vmul.f32 %v258, %v709
        %vm712 = vcmask 130048
        %713 = vst.msk [vmem:[%s256] sm:$0xff] %vm712, %v710
        %714 = vst.msk [vmem:[%s256 + $0x8] sm:$0xff] %vm712, %v711
        %v715 = vmul.f32 %v260, %v707
        %v716 = vmul.f32 %v261, %v709
        %s717 = scalar_lea.vmem %s256, 16 [#allocation10]
        %718 = vst.msk [vmem:[%s717] sm:$0xff] %vm712, %v715
        %719 = vst.msk [vmem:[%s717 + $0x8] sm:$0xff] %vm712, %v716
        %v720 = vmul.f32 %v263, %v707
        %v721 = vmul.f32 %v264, %v709
        %s722 = scalar_lea.vmem %s256, 32 [#allocation10]
        %723 = vst.msk [vmem:[%s722] sm:$0xff] %vm712, %v720
        %724 = vst.msk [vmem:[%s722 + $0x8] sm:$0xff] %vm712, %v721
        %v725 = vmul.f32 %v266, %v707
        %v726 = vmul.f32 %v267, %v709
        %s727 = scalar_lea.vmem %s256, 48 [#allocation10]
        %728 = vst.msk [vmem:[%s727] sm:$0xff] %vm712, %v725
        %729 = vst.msk [vmem:[%s727 + $0x8] sm:$0xff] %vm712, %v726
        %s730 = sand.u32 %s120, 1
        %s731 = scalar_lea.sflag [#allocation4], %s730
        %s732 = sand.u32 %s120, 1
        %s733 = smul.addr %s732, 64
        %s734 = scalar_lea.vmem [#allocation10], %s733
        // Predicated region
        $region53: #{tpu_custom_call.1} parent=35 // pred_check
          %p735 = pneg %p130
        $region54: #{tpu_custom_call.1} parent=35 // pred_check_branch
          %737 = sbr.rel (%p735) target = $region56
        $region55: #{tpu_custom_call.1} parent=35 // pred_region
          %s739 = ssub.s32 1024, 1024
          %740 = vsyncadd %s731, %s739
          %s741 = smul.addr %s23, 8
          %s742 = smul.addr %s741, 128
          %s743 = scalar_lea.hbm %s4, %s742
          %s744 = sshll.u32 %s734, 4
          %s745 = int_to_ptr.vmem [resolvable:$true] %s744
          %750 = dma.vmem_to_hbm [thread:$0]  %s745, 1024, %s743, %s731, 128, 128, 8
        $region56: #{tpu_custom_call.1} parent=35 // pred_fallthru
          _
      $region36: #{tpu_custom_call.1} parent=5 // pred_fallthru
        _
      %p751 = scmp.le.s32.totalorder 2, %s18
      // Predicated region
      $region57: #{tpu_custom_call.1} parent=5 // pred_check
        %p752 = pneg %p751
      $region58: #{tpu_custom_call.1} parent=5 // pred_check_branch
        %754 = sbr.rel (%p752) target = $region60
      $region59: #{tpu_custom_call.1} parent=5 // pred_region
        %s755 = ssub.s32 %s18, 2
        // Predicated region
        $region61: #{tpu_custom_call.1} parent=59 // pred_check
          %p756 = pneg %p136
        $region62: #{tpu_custom_call.1} parent=59 // pred_check_branch
          %758 = sbr.rel (%p756) target = $region64
        $region63: #{tpu_custom_call.1} parent=59 // pred_region
          %s759 = sand.u32 %s121, 1
          %s760 = scalar_lea.sflag [#allocation4], %s759
          %s761 = sand.u32 %s121, 1
          %s762 = smul.addr %s761, 64
          %s763 = scalar_lea.vmem [#allocation10], %s762
          %764 = dma.done %s760, 1024
        $region64: #{tpu_custom_call.1} parent=59 // pred_fallthru
          _
      $region60: #{tpu_custom_call.1} parent=5 // pred_fallthru
        _
    $region6: #{tpu_custom_call.1} parent=1 // loop_footer
      %s22 = sadd.s32 1, %s18
    $region7: #{tpu_custom_call.1} parent=1 // loop_footer_branch
      %17 = sbr.rel target = $region3
    $region8: #{tpu_custom_call.1} parent=1 // loop_exit
      _
    %765 = vsyncpa [#allocation3], 1
    %s766 = scalar_lea.sflag [#allocation3], 1
    %767 = vsyncpa %s766, 1
    %768 = vsyncpa [#allocation4], 1
    %s769 = scalar_lea.sflag [#allocation4], 1
    %770 = vsyncpa %s769, 1
    %771 = vsyncpa [#allocation5], 1
    %s772 = scalar_lea.sflag [#allocation5], 1
    %773 = vsyncpa %s772, 1
    %774 = vsyncpa [#allocation8], 1

</llo_original>
